<compile_context>
chip_gen: v7x
topology: tpu7x:2x2x1
jax: 0.10.0
libtpu: 0.0.40
codegen_flags: <defaults>
</compile_context>

<pallas_src>
import functools

import numpy as np
import jax
import jax.numpy as jnp
from jax.experimental import pallas as pl
from jax.experimental.pallas import tpu as pltpu


# ---------------------------------------------------------------------------
# Deterministic mel filterbank (librosa-style slaney mel scale), no file I/O.
# ---------------------------------------------------------------------------
def _hz_to_mel_slaney(f):
    f = np.asarray(f, dtype=np.float64)
    f_sp = 200.0 / 3.0
    mels = f / f_sp
    min_log_hz = 1000.0
    min_log_mel = min_log_hz / f_sp
    logstep = np.log(6.4) / 27.0
    log_region = f >= min_log_hz
    mels = np.where(log_region,
                    min_log_mel + np.log(np.maximum(f, 1e-10) / min_log_hz) / logstep,
                    mels)
    return mels


def _mel_to_hz_slaney(m):
    m = np.asarray(m, dtype=np.float64)
    f_sp = 200.0 / 3.0
    freqs = f_sp * m
    min_log_hz = 1000.0
    min_log_mel = min_log_hz / f_sp
    logstep = np.log(6.4) / 27.0
    log_region = m >= min_log_mel
    freqs = np.where(log_region, min_log_hz * np.exp(logstep * (m - min_log_mel)), freqs)
    return freqs


def mel_filterbank(sample_rate, n_fft, n_mels, fmin=0.0, fmax=None):
    """Equivalent of librosa.filters.mel(sr, n_fft, n_mels) (slaney scale + slaney norm)."""
    if fmax is None:
        fmax = sample_rate / 2.0
    n_freq = n_fft // 2 + 1
    fftfreqs = np.linspace(0.0, sample_rate / 2.0, n_freq)

    mel_min = _hz_to_mel_slaney(fmin)
    mel_max = _hz_to_mel_slaney(fmax)
    mel_pts = np.linspace(mel_min, mel_max, n_mels + 2)
    mel_f = _mel_to_hz_slaney(mel_pts)

    fdiff = np.diff(mel_f)
    ramps = mel_f[:, None] - fftfreqs[None, :]
    lower = -ramps[:-2] / fdiff[:-1][:, None]
    upper = ramps[2:] / fdiff[1:][:, None]
    weights = np.maximum(0.0, np.minimum(lower, upper))

    # slaney norm (librosa default)
    enorm = 2.0 / (mel_f[2:n_mels + 2] - mel_f[:n_mels])
    weights = weights * enorm[:, None]
    return weights.astype(np.float64)  # shape (n_mels, n_freq)


# ---------------------------------------------------------------------------
# Pallas kernel: row-tiled GEMM (+ optional bias) (+ optional clamp).
# ---------------------------------------------------------------------------
def _proj_kernel(*refs, clamp, has_bias):
    if has_bias:
        x_ref, w_ref, b_ref, o_ref = refs
    else:
        x_ref, w_ref, o_ref = refs
    # x_ref: (tm, K)  w_ref: (K, N)  [b_ref: (1, N)]  o_ref: (tm, N)   -- all VMEM
    y = jnp.dot(x_ref[...], w_ref[...], preferred_element_type=jnp.float32)
    if has_bias:
        y = y + b_ref[...]
    if clamp:
        y = jnp.clip(y, 0.0, 1.0)
    o_ref[...] = y.astype(o_ref.dtype)


def _round_up(x, m):
    return ((x + m - 1) // m) * m


def _gemm_bias_clamp(x, w, bias=None, *, clamp=False, tm_target=1024):
    """out = clamp(x @ w (+ bias)).  x: (M, K), w: (K, N), bias: (N,) or None."""
    M, K = x.shape
    Kw, N = w.shape
    assert K == Kw, (K, Kw)

    a = 8  # sublane alignment for the row tile
    # VMEM guard: the x block is double-buffered, keep one buffer <= ~8 MiB so the total
    # working set stays far below the default 32 MiB scoped VMEM (v7x: 64 MiB physical).
    bytes_per_row = K * x.dtype.itemsize
    tm_cap = max(a, (8 * 1024 * 1024 // bytes_per_row) // a * a)
    # Large tile (kernel is HBM-read-bound; per-grid-step overhead ~0.35us), but keep at
    # least 2 grid steps when M allows so both v7x TensorCores get work.
    tm = min(tm_target, tm_cap, _round_up(pl.cdiv(M, 2), a))
    tm = max(a, (tm // a) * a)

    M_pad = _round_up(M, tm)
    if M_pad != M:
        # Full-copy pad only when M is not a tile multiple (a ragged-grid / masked-tail
        # variant could remove this extra pass for very large, oddly-sized M).
        x = jnp.pad(x, ((0, M_pad - M), (0, 0)))

    has_bias = bias is not None
    operands = [x, w]
    in_specs = [
        # Last dim == full array dim -> contiguous HBM DMA per block; tm % 8 == 0.
        pl.BlockSpec((tm, K), lambda i: (i, 0)),
        # Full-array weight block, constant index_map -> stays resident in VMEM.
        pl.BlockSpec((K, N), lambda i: (0, 0)),
    ]
    if has_bias:
        operands.append(jnp.asarray(bias, x.dtype).reshape(1, N))
        in_specs.append(pl.BlockSpec((1, N), lambda i: (0, 0)))

    kernel = functools.partial(_proj_kernel, clamp=clamp, has_bias=has_bias)
    out = pl.pallas_call(
        kernel,
        out_shape=jax.ShapeDtypeStruct((M_pad, N), x.dtype),
        grid=(M_pad // tm,),
        in_specs=in_specs,
        # Output block spans the full last dim -> writeback DMA is a contiguous HBM range.
        out_specs=pl.BlockSpec((tm, N), lambda i: (i, 0)),
        compiler_params=pltpu.CompilerParams(
            dimension_semantics=("parallel",)),
    )(*operands)

    return out[:M]


def mel_project(data, weight, bias=None, *, clamp=False, tm_target=1024,
                max_fused_sources=8):
    """
    data  : (B, T, in_dim, S)
    weight: (out_dim, in_dim)  (nn.Linear weight layout)
    bias  : (out_dim,) or None (None == known-zero bias, skips the add entirely)
    returns (B, T, out_dim, S)
    """
    B, T, Fin, S = data.shape
    out_dim, in_dim = weight.shape
    if Fin != in_dim:
        raise ValueError(f"data dim 2 ({Fin}) must match weight in_dim ({in_dim})")

    wt = jnp.transpose(weight).astype(data.dtype)  # (in_dim, out_dim)

    if 1 <= S <= max_fused_sources:
        # Fuse the source axis into the GEMM with a block-diagonal weight so the kernel
        # consumes `data` in its native (B*T, in_dim*S) layout and writes the output
        # already in (.., out_dim, S) order: zero wrapper-side transposes / HBM passes.
        # W_big[f*S+s, o*S+s'] = W[o, f] * (s == s'); weight is tiny and built once.
        eye = jnp.eye(S, dtype=wt.dtype)
        w_big = jnp.einsum('fo,st->fsot', wt, eye).reshape(in_dim * S, out_dim * S)
        b_big = None if bias is None else jnp.repeat(jnp.asarray(bias, data.dtype), S)
        x = data.reshape(B * T, in_dim * S)                 # free (contiguous) reshape
        y = _gemm_bias_clamp(x, w_big, b_big, clamp=clamp, tm_target=tm_target)
        return y.reshape(B, T, out_dim, S)                  # free reshape

    # Fallback for very many sources (S^2 weight blow-up not worth it): explicit transpose.
    x = jnp.transpose(data, (0, 1, 3, 2)).reshape(B * T * S, in_dim)
    y = _gemm_bias_clamp(x, wt, bias, clamp=clamp, tm_target=tm_target)
    return jnp.transpose(y.reshape(B, T, S, out_dim), (0, 1, 3, 2))


# ---------------------------------------------------------------------------
# Module-equivalent wrapper (parameter construction as in MelProjection.__init__)
# ---------------------------------------------------------------------------
def make_mel_projection(sample_rate, num_frequencies, num_mels,
                        direction='forward', clamp=False, normalize=True):
    if direction not in ('forward', 'backward'):
        raise ValueError("direction must be one of ['backward', 'forward']!")

    if num_mels <= 0:
        @jax.jit
        def forward(data):
            return jnp.clip(data, 0.0, 1.0) if clamp else data
        return forward, None, None

    mel = mel_filterbank(sample_rate, 2 * (num_frequencies - 1), num_mels)
    if normalize:
        mel = (mel.T / (mel.sum(axis=1) + 1e-8)).T
    if direction == 'forward':
        filter_bank = mel                      # (num_mels, num_freq) == Linear(F, M).weight
    else:
        filter_bank = np.linalg.pinv(mel)      # (num_freq, num_mels) == Linear(M, F).weight
    weight = jnp.asarray(filter_bank, dtype=jnp.float32)
    out_dim = weight.shape[0]
    bias = jnp.zeros((out_dim,), dtype=jnp.float32)  # module zero-inits bias

    @jax.jit
    def forward(data):
        # Bias is identically zero (nn.init.constant_(bias, 0.0)) -> skip the add/DMA.
        return mel_project(data, weight, bias=None, clamp=clamp)

    return forward, weight, bias


if __name__ == "__main__":
    # Small, forward-direction example: n_fft = 256 -> 129 frequency bins, 16 mels.
    sample_rate = 16000
    num_frequencies = 129
    num_mels = 16
    B, T, S = 2, 8, 2

    fwd, weight, bias = make_mel_projection(
        sample_rate, num_frequencies, num_mels, direction='forward', clamp=True)

    key = jax.random.PRNGKey(0)
    data = jax.random.uniform(key, (B, T, num_frequencies, S), dtype=jnp.float32)

    out = jax.block_until_ready(fwd(data))
    assert out.shape == (B, T, num_mels, S), out.shape

    # Reference check in plain JAX (same math as the PyTorch module).
    ref = jnp.transpose(data, (0, 1, 3, 2)) @ weight.T + bias
    ref = jnp.clip(jnp.transpose(ref, (0, 1, 3, 2)), 0.0, 1.0)
    np.testing.assert_allclose(np.asarray(out), np.asarray(ref), rtol=1e-5, atol=1e-5)

    # Also exercise the nonzero-bias / no-clamp path (trainable-Linear case).
    bias2 = 0.1 * jax.random.normal(jax.random.PRNGKey(1), (num_mels,), dtype=jnp.float32)
    out2 = jax.block_until_ready(mel_project(data, weight, bias2, clamp=False))
    ref2 = jnp.transpose(data, (0, 1, 3, 2)) @ weight.T + bias2
    ref2 = jnp.transpose(ref2, (0, 1, 3, 2))
    np.testing.assert_allclose(np.asarray(out2), np.asarray(ref2), rtol=1e-5, atol=1e-5)

    print("KERNEL_OK")
</pallas_src>

<mosaic_0001>
module attributes {stable_mosaic.version = 11 : i64} {
  func.func @_proj_kernel(%arg0: i32, %arg1: memref<8x258xf32, #tpu.memory_space<vmem>>, %arg2: memref<258x32xf32, #tpu.memory_space<vmem>>, %arg3: memref<8x32xf32, #tpu.memory_space<vmem>>) attributes {dimension_semantics = [#tpu.dimension_semantics<parallel>], iteration_bounds = array<i64: 2>, scalar_prefetch = 0 : i64, scratch_operands = 0 : i64, tpu.core_type = #tpu.core_type<tc>, window_params = [{transform_indices = @transform_0, window_bounds = array<i64: 8, 258>}, {pipeline_mode = #tpu.pipeline_mode<synchronous>, transform_indices = @transform_1, window_bounds = array<i64: 258, 32>}, {transform_indices = @transform_2, window_bounds = array<i64: 8, 32>}]} {
    %c0 = arith.constant 0 : index
    %c0_0 = arith.constant 0 : index
    %0 = vector.load %arg1[%c0, %c0_0] : memref<8x258xf32, #tpu.memory_space<vmem>>, vector<8x258xf32>
    %c0_1 = arith.constant 0 : index
    %c0_2 = arith.constant 0 : index
    %1 = vector.load %arg2[%c0_1, %c0_2] : memref<258x32xf32, #tpu.memory_space<vmem>>, vector<258x32xf32>
    %cst = arith.constant dense<0.000000e+00> : vector<8x32xf32>
    %2 = tpu.matmul %0, %1, %cst {dimension_numbers = #tpu.dot_dimension_numbers<[1], [0], [0], [1], [0, 0, 1, 1], [], []>} : vector<8x258xf32>, vector<258x32xf32>, vector<8x32xf32> -> vector<8x32xf32>
    %cst_3 = arith.constant 0.000000e+00 : f32
    %cst_4 = arith.constant 1.000000e+00 : f32
    %3 = vector.broadcast %cst_3 : f32 to vector<8x32xf32>
    %4 = arith.maximumf %3, %2 : vector<8x32xf32>
    %5 = vector.broadcast %cst_4 : f32 to vector<8x32xf32>
    %6 = arith.minimumf %5, %4 : vector<8x32xf32>
    %c0_5 = arith.constant 0 : index
    %c0_6 = arith.constant 0 : index
    %7 = vector.load %arg3[%c0_5, %c0_6] : memref<8x32xf32, #tpu.memory_space<vmem>>, vector<8x32xf32>
    tpu.vector_store %arg3[%c0_5, %c0_6], %6 {strides = array<i32>} : memref<8x32xf32, #tpu.memory_space<vmem>>, vector<8x32xf32>,
    return
  }
  func.func @transform_0(%arg0: i32) -> (i32, i32) {
    %c0_i32 = arith.constant 0 : i32
    %c0_i32_0 = arith.constant 0 : i32
    return %arg0, %c0_i32 : i32, i32
  }
  func.func @transform_1(%arg0: i32) -> (i32, i32) {
    %c0_i32 = arith.constant 0 : i32
    %c0_i32_0 = arith.constant 0 : i32
    %c0_i32_1 = arith.constant 0 : i32
    return %c0_i32, %c0_i32_0 : i32, i32
  }
  func.func @transform_2(%arg0: i32) -> (i32, i32) {
    %c0_i32 = arith.constant 0 : i32
    %c0_i32_0 = arith.constant 0 : i32
    return %arg0, %c0_i32 : i32, i32
  }
}

</mosaic_0001>

<llo_original>
// kernel: forward.1
$region0: #{forward.1}
  #allocation0 [shape = 'u32[]', space=smem, size = 0x4, offset = 0x4, fixed_abs, tag = 'smem constant byte address 0x4 - core index']
  #allocation1 [shape = 'u32[144,128]{1,0:T(1,128)}', space=vmem, size = 0x12000, scoped, tag = 'internal scratch']
  %s0 = inlined_call_operand.vmem [shape: f32[16,258], index: 0, kind: input, shape index: {}]
  %s1 = inlined_call_operand.vmem [shape: f32[258,32], index: 1, kind: input, shape index: {}]
  %s2 = inlined_call_operand.vmem [shape: f32[16,32], index: 2, kind: output, shape index: {}]
  %s3 = sld [smem:[#allocation0]]
  $region41: #{forward.1} parent=0
    _
  %s5 = ssub.s32 1, %s3
  %s6 = scalar_select 0, %s5, %s3
  loop: start=0, step=1, limit=4
  $region2: #{forward.1} parent=0 // loop_pre_header
    _
  $region3: #{forward.1} parent=0 // loop_header
    %s8 = sphi 0, %s12
    %p9 = scmp.ge.s32.totalorder %s8, 4
    %s18 = sphi 0, %s20
    %s21 = sphi 0, %s18
    %s22 = sphi 0, %s21
    %s38 = sphi 0, %s22
    %s42 = sphi 0, %s42
    %s44 = sphi 0, %s42
    %s45 = sphi 0, %s44
    %s59 = sphi 0, %s45
    %s65 = sphi 0, %s67
    %s68 = sphi 0, %s65
    %s69 = sphi 0, %s68
    %s85 = sphi 0, %s69
  $region4: #{forward.1} parent=0 // loop_header_branch
    %11 = sbr.rel (%p9) target = $region8
  $region5: #{forward.1} parent=0 // loop_body
    %s13 = ssub.s32 %s8, 1
    %s14 = ssub.s32 %s8, 2
    %s15 = sadd.s32 %s8, 1
    %s16 = ssub.s32 %s8, %s15
    %p17 = scmp.eq.s32.totalorder %s16, 0
    %s19 = sadd.s32 %s18, 1
    %s20 = scalar_select %p17, %s18, %s19
    %p23 = pneg %p17
    %p24 = scmp.eq.s32.totalorder %s8, 1
    %p25 = por %p23, %p24
    %p26 = scmp.ne.s32.totalorder %s18, %s21
    %p27 = scmp.eq.s32.totalorder %s8, 0
    %p28 = por %p26, %p27
    %p29 = scmp.ne.s32.totalorder %s18, %s21
    %p30 = scmp.eq.s32.totalorder %s13, 1
    %p31 = por %p29, %p30
    %p32 = scmp.ne.s32.totalorder %s21, %s22
    %p33 = scmp.eq.s32.totalorder %s13, 0
    %p34 = por %p32, %p33
    %p35 = scmp.ne.s32.totalorder %s21, %s22
    %p36 = scmp.eq.s32.totalorder %s14, 1
    %p37 = por %p35, %p36
    %p39 = scmp.ne.s32.totalorder %s22, %s38
    %p40 = scmp.eq.s32.totalorder %s14, 0
    %p41 = por %p39, %p40
    %s43 = sadd.s32 %s42, 1
    %p46 = scmp.eq.s32.totalorder %s8, 1
    %p47 = scmp.ne.s32.totalorder %s42, %s44
    %p48 = scmp.eq.s32.totalorder %s8, 0
    %p49 = por %p47, %p48
    %p50 = scmp.ne.s32.totalorder %s42, %s44
    %p51 = scmp.eq.s32.totalorder %s13, 1
    %p52 = por %p50, %p51
    %p53 = scmp.ne.s32.totalorder %s44, %s45
    %p54 = scmp.eq.s32.totalorder %s13, 0
    %p55 = por %p53, %p54
    %p56 = scmp.ne.s32.totalorder %s44, %s45
    %p57 = scmp.eq.s32.totalorder %s14, 1
    %p58 = por %p56, %p57
    %p60 = scmp.ne.s32.totalorder %s45, %s59
    %p61 = scmp.eq.s32.totalorder %s14, 0
    %p62 = por %p60, %p61
    %s63 = ssub.s32 %s8, %s15
    %p64 = scmp.eq.s32.totalorder %s63, 0
    %s66 = sadd.s32 %s65, 1
    %s67 = scalar_select %p64, %s65, %s66
    %p70 = pneg %p64
    %p71 = scmp.eq.s32.totalorder %s8, 1
    %p72 = por %p70, %p71
    %p73 = scmp.ne.s32.totalorder %s65, %s68
    %p74 = scmp.eq.s32.totalorder %s8, 0
    %p75 = por %p73, %p74
    %p76 = scmp.ne.s32.totalorder %s65, %s68
    %p77 = scmp.eq.s32.totalorder %s13, 1
    %p78 = por %p76, %p77
    %p79 = scmp.ne.s32.totalorder %s68, %s69
    %p80 = scmp.eq.s32.totalorder %s13, 0
    %p81 = por %p79, %p80
    %p82 = scmp.ne.s32.totalorder %s68, %s69
    %p83 = scmp.eq.s32.totalorder %s14, 1
    %p84 = por %p82, %p83
    %p86 = scmp.ne.s32.totalorder %s69, %s85
    %p87 = scmp.eq.s32.totalorder %s14, 0
    %p88 = por %p86, %p87
    %p89 = scmp.le.s32.totalorder 1, %s8
    %p90 = scmp.lt.s32.totalorder %s8, 3
    %p91 = pnand %p89, %p90
    %p92 = pneg %p91
    // Predicated region
    $region9: #{forward.1} parent=5 // pred_check
      _
    $region10: #{forward.1} parent=5 // pred_check_branch
      %94 = sbr.rel (%p91) target = $region12
    $region11: #{forward.1} parent=5 // pred_region
      %s95 = ssub.s32 %s8, 1
      // Predicated region
      $region13: #{forward.1} parent=11 // pred_check
        %p96 = pneg %p55
      $region14: #{forward.1} parent=11 // pred_check_branch
        %98 = sbr.rel (%p96) target = $region16
      $region15: #{forward.1} parent=11 // pred_region
        _
      $region16: #{forward.1} parent=11 // pred_fallthru
        _
    $region12: #{forward.1} parent=5 // pred_fallthru
      _
    %p99 = scmp.lt.s32.totalorder %s8, 2
    // Predicated region
    $region17: #{forward.1} parent=5 // pred_check
      %p100 = pneg %p99
    $region18: #{forward.1} parent=5 // pred_check_branch
      %102 = sbr.rel (%p100) target = $region20
    $region19: #{forward.1} parent=5 // pred_region
      // Predicated region
      $region21: #{forward.1} parent=19 // pred_check
        %p103 = pneg %p28
      $region22: #{forward.1} parent=19 // pred_check_branch
        %105 = sbr.rel (%p103) target = $region24
      $region23: #{forward.1} parent=19 // pred_region
        %p106 = scmp.lt.s32.totalorder %s8, 1
        %s107 = scalar_select %p106, %s8, 1
        %s108 = smul.addr %s107, 3
        %s109 = smul.addr %s108, 8
        %s110 = scalar_lea.vmem %s0, %s109
      $region24: #{forward.1} parent=19 // pred_fallthru
        _
    $region20: #{forward.1} parent=5 // pred_fallthru
      _
    %p111 = scmp.le.s32.totalorder 1, %s8
    %p112 = scmp.lt.s32.totalorder %s8, 3
    %p113 = pnand %p111, %p112
    %p114 = pneg %p113
    // Predicated region
    $region25: #{forward.1} parent=5 // pred_check
      _
    $region26: #{forward.1} parent=5 // pred_check_branch
      %116 = sbr.rel (%p113) target = $region28
    $region27: #{forward.1} parent=5 // pred_region
      %s117 = ssub.s32 %s8, 1
      %p118 = scmp.lt.s32.totalorder %s13, 1
      %s119 = scalar_select %p118, %s13, 1
      %s120 = smul.addr %s119, 3
      %s121 = smul.addr %s120, 8
      %s122 = scalar_lea.vmem %s0, %s121
      %p123 = pneg %p34
      %p124 = pneg %p31
      %p125 = pneg %p55
      %p126 = pneg %p52
      %p127 = pneg %p81
      %p128 = pneg %p78
      %p129 = scmp.lt.s32.totalorder %s13, 1
      %s130 = scalar_select %p129, %s13, 1
      %s131 = smul.addr %s130, 8
      %s132 = scalar_lea.vmem %s2, %s131
      %p133 = scmp.lt.s32.totalorder %s13, 1
      %s134 = scalar_select %p133, %s13, 1
      %s135 = smul.addr %s134, 3
      %s136 = smul.addr %s135, 8
      %s137 = scalar_lea.vmem %s0, %s136
      %p138 = scmp.lt.s32.totalorder %s13, 1
      %s139 = scalar_select %p138, %s13, 1
      %s140 = smul.addr %s139, 8
      %s141 = scalar_lea.vmem %s2, %s140
      %v142 = vld [vmem:[%s137] sm:$0xff]
      %v143 = vld [vmem:[%s137 + $0x8] sm:$0xff]
      %v144 = vld [vmem:[%s137 + $0x10] sm:$0xff]
      %v145 = vld [vmem:[%s1] sm:$0xff]
      %v146 = vld [vmem:[%s1 + $0x8] sm:$0xff]
      %v147 = vld [vmem:[%s1 + $0x10] sm:$0xff]
      %v148 = vld [vmem:[%s1 + $0x18] sm:$0xff]
      %v149 = vld [vmem:[%s1 + $0x20] sm:$0xff]
      %v150 = vld [vmem:[%s1 + $0x28] sm:$0xff]
      %v151 = vld [vmem:[%s1 + $0x30] sm:$0xff]
      %v152 = vld [vmem:[%s1 + $0x38] sm:$0xff]
      %v153 = vld [vmem:[%s1 + $0x40] sm:$0xff]
      %v154 = vld [vmem:[%s1 + $0x48] sm:$0xff]
      %v155 = vld [vmem:[%s1 + $0x50] sm:$0xff]
      %v156 = vld [vmem:[%s1 + $0x58] sm:$0xff]
      %v157 = vld [vmem:[%s1 + $0x60] sm:$0xff]
      %v158 = vld [vmem:[%s1 + $0x68] sm:$0xff]
      %v159 = vld [vmem:[%s1 + $0x70] sm:$0xff]
      %v160 = vld [vmem:[%s1 + $0x78] sm:$0xff]
      %v161 = vld [vmem:[%s1 + $0x80] sm:$0xff]
      %v162 = vld [vmem:[%s1 + $0x88] sm:$0xff]
      %v163 = vld [vmem:[%s1 + $0x90] sm:$0xff]
      %v164 = vld [vmem:[%s1 + $0x98] sm:$0xff]
      %v165 = vld [vmem:[%s1 + $0xa0] sm:$0xff]
      %v166 = vld [vmem:[%s1 + $0xa8] sm:$0xff]
      %v167 = vld [vmem:[%s1 + $0xb0] sm:$0xff]
      %v168 = vld [vmem:[%s1 + $0xb8] sm:$0xff]
      %v169 = vld [vmem:[%s1 + $0xc0] sm:$0xff]
      %v170 = vld [vmem:[%s1 + $0xc8] sm:$0xff]
      %v171 = vld [vmem:[%s1 + $0xd0] sm:$0xff]
      %v172 = vld [vmem:[%s1 + $0xd8] sm:$0xff]
      %v173 = vld [vmem:[%s1 + $0xe0] sm:$0xff]
      %v174 = vld [vmem:[%s1 + $0xe8] sm:$0xff]
      %v175 = vld [vmem:[%s1 + $0xf0] sm:$0xff]
      %v176 = vld [vmem:[%s1 + $0xf8] sm:$0xff]
      %v177 = vld [vmem:[%s1 + $0x100] sm:$0x3]
      %vm178 = vcmask 15360
      %v180 = vsel %vm178, %v144, 0
      %vm182 = vcmask 1041408
      %v184 = vsel %vm182, %v177, 0
      %186 = vmatprep.subr.mxu0 0.0
      %187 = vmatpush1.msra.mxu0 %v145
      %188 = vmatprep.subr.mxu0 0.0
      %189 = vmatpush1.msra.mxu0 %v146
      %190 = vmatprep.subr.mxu0 0.0
      %191 = vmatpush1.msra.mxu0 %v147
      %192 = vmatprep.subr.mxu0 0.0
      %193 = vmatpush1.msra.mxu0 %v148
      %194 = vmatprep.subr.mxu0 0.0
      %195 = vmatpush1.msra.mxu0 %v149
      %196 = vmatprep.subr.mxu0 0.0
      %197 = vmatpush1.msra.mxu0 %v150
      %198 = vmatprep.subr.mxu0 0.0
      %199 = vmatpush1.msra.mxu0 %v151
      %200 = vmatprep.subr.mxu0 0.0
      %201 = vmatpush1.msra.mxu0 %v152
      %202 = vmatprep.subr.mxu0 0.0
      %203 = vmatpush1.msra.mxu0 %v153
      %204 = vmatprep.subr.mxu0 0.0
      %205 = vmatpush1.msra.mxu0 %v154
      %206 = vmatprep.subr.mxu0 0.0
      %207 = vmatpush1.msra.mxu0 %v155
      %208 = vmatprep.subr.mxu0 0.0
      %209 = vmatpush1.msra.mxu0 %v156
      %210 = vmatprep.subr.mxu0 0.0
      %211 = vmatpush1.msra.mxu0 %v157
      %212 = vmatprep.subr.mxu0 0.0
      %213 = vmatpush1.msra.mxu0 %v158
      %214 = vmatprep.subr.mxu0 0.0
      %215 = vmatpush1.msra.mxu0 %v159
      %216 = vmatprep.subr.mxu0 0.0
      %217 = vmatpush1.msra.mxu0 %v160
      %218 = vmatprep.subr.mxu0 0.0
      %219 = vmatpush1.msra.mxu0 %v161
      %220 = vmatprep.subr.mxu0 0.0
      %221 = vmatpush1.msra.mxu0 %v162
      %222 = vmatprep.subr.mxu0 0.0
      %223 = vmatpush1.msra.mxu0 %v163
      %224 = vmatprep.subr.mxu0 0.0
      %225 = vmatpush1.msra.mxu0 %v164
      %226 = vmatprep.subr.mxu0 0.0
      %227 = vmatpush1.msra.mxu0 %v165
      %228 = vmatprep.subr.mxu0 0.0
      %229 = vmatpush1.msra.mxu0 %v166
      %230 = vmatprep.subr.mxu0 0.0
      %231 = vmatpush1.msra.mxu0 %v167
      %232 = vmatprep.subr.mxu0 0.0
      %233 = vmatpush1.msra.mxu0 %v168
      %234 = vmatprep.subr.mxu0 0.0
      %235 = vmatpush1.msra.mxu0 %v169
      %236 = vmatprep.subr.mxu0 0.0
      %237 = vmatpush1.msra.mxu0 %v170
      %238 = vmatprep.subr.mxu0 0.0
      %239 = vmatpush1.msra.mxu0 %v171
      %240 = vmatprep.subr.mxu0 0.0
      %241 = vmatpush1.msra.mxu0 %v172
      %242 = vmatprep.subr.mxu0 0.0
      %243 = vmatpush1.msra.mxu0 %v173
      %244 = vmatprep.subr.mxu0 0.0
      %245 = vmatpush1.msra.mxu0 %v174
      %246 = vmatprep.subr.mxu0 0.0
      %247 = vmatpush1.msra.mxu0 %v175
      %248 = vmatprep.subr.mxu0 0.0
      %249 = vmatpush1.msra.mxu0 %v176
      %250 = vmatprep.mubr.f32.mxu0 %v143
      %251 = vmatmul.mubr.f32.gmra.mrb[0].mxu0 %v142
      %v252 = vpop.f32.mrb[0].mxu0
      %v253 = vadd.f32 0.0, %v252
      %v254 = vpop.f32.mrb[0].mxu0
      %255 = vdwg.mxu0
      %256 = vmatprep.subr.mxu0 0.0
      %257 = vmatpush1.msra.mxu0 %v184
      %258 = vmatprep.subr.mxu0 0.0
      %259 = vmatpush1.msra.mxu0 0.0
      %260 = vmatprep.subr.mxu0 0.0
      %261 = vmatpush1.msra.mxu0 0.0
      %262 = vmatprep.subr.mxu0 0.0
      %263 = vmatpush1.msra.mxu0 0.0
      %264 = vmatprep.subr.mxu0 0.0
      %265 = vmatpush1.msra.mxu0 0.0
      %266 = vmatprep.subr.mxu0 0.0
      %267 = vmatpush1.msra.mxu0 0.0
      %268 = vmatprep.subr.mxu0 0.0
      %269 = vmatpush1.msra.mxu0 0.0
      %270 = vmatprep.subr.mxu0 0.0
      %271 = vmatpush1.msra.mxu0 0.0
      %272 = vmatprep.subr.mxu0 0.0
      %273 = vmatpush1.msra.mxu0 0.0
      %274 = vmatprep.subr.mxu0 0.0
      %275 = vmatpush1.msra.mxu0 0.0
      %276 = vmatprep.subr.mxu0 0.0
      %277 = vmatpush1.msra.mxu0 0.0
      %278 = vmatprep.subr.mxu0 0.0
      %279 = vmatpush1.msra.mxu0 0.0
      %280 = vmatprep.subr.mxu0 0.0
      %281 = vmatpush1.msra.mxu0 0.0
      %282 = vmatprep.subr.mxu0 0.0
      %283 = vmatpush1.msra.mxu0 0.0
      %284 = vmatprep.subr.mxu0 0.0
      %285 = vmatpush1.msra.mxu0 0.0
      %286 = vmatprep.subr.mxu0 0.0
      %287 = vmatpush1.msra.mxu0 0.0
      %288 = vmatprep.subr.mxu0 0.0
      %289 = vmatpush1.msra.mxu0 0.0
      %290 = vmatprep.subr.mxu0 0.0
      %291 = vmatpush1.msra.mxu0 0.0
      %292 = vmatprep.subr.mxu0 0.0
      %293 = vmatpush1.msra.mxu0 0.0
      %294 = vmatprep.subr.mxu0 0.0
      %295 = vmatpush1.msra.mxu0 0.0
      %296 = vmatprep.subr.mxu0 0.0
      %297 = vmatpush1.msra.mxu0 0.0
      %298 = vmatprep.subr.mxu0 0.0
      %299 = vmatpush1.msra.mxu0 0.0
      %300 = vmatprep.subr.mxu0 0.0
      %301 = vmatpush1.msra.mxu0 0.0
      %302 = vmatprep.subr.mxu0 0.0
      %303 = vmatpush1.msra.mxu0 0.0
      %304 = vmatprep.subr.mxu0 0.0
      %305 = vmatpush1.msra.mxu0 0.0
      %306 = vmatprep.subr.mxu0 0.0
      %307 = vmatpush1.msra.mxu0 0.0
      %308 = vmatprep.subr.mxu0 0.0
      %309 = vmatpush1.msra.mxu0 0.0
      %310 = vmatprep.subr.mxu0 0.0
      %311 = vmatpush1.msra.mxu0 0.0
      %312 = vmatprep.subr.mxu0 0.0
      %313 = vmatpush1.msra.mxu0 0.0
      %314 = vmatprep.subr.mxu0 0.0
      %315 = vmatpush1.msra.mxu0 0.0
      %316 = vmatprep.subr.mxu0 0.0
      %317 = vmatpush1.msra.mxu0 0.0
      %318 = vmatprep.subr.mxu0 0.0
      %319 = vmatpush1.msra.mxu0 0.0
      %320 = vmatprep.mubr.f32.mxu0 0.0
      %321 = vmatmul.mubr.f32.gmra.mrb[0].mxu0 %v180
      %v322 = vpop.f32.mrb[0].mxu0
      %v323 = vadd.f32 %v253, %v322
      %v324 = vpop.f32.mrb[0].mxu0
      %325 = vdwg.mxu0
      %v326 = vmax.f32 %v323, 0.0
      %v327 = vmin.f32 %v326, 1.0
      %vm328 = vcmask 261120
      %329 = vst.msk [vmem:[%s141] sm:$0xff] %vm328, %v327
      %p330 = scmp.lt.s32.totalorder %s13, 1
      %s331 = scalar_select %p330, %s13, 1
      %s332 = smul.addr %s331, 8
      %s333 = scalar_lea.vmem %s2, %s332
      // Predicated region
      $region29: #{forward.1} parent=27 // pred_check
        %p334 = pneg %p78
      $region30: #{forward.1} parent=27 // pred_check_branch
        %336 = sbr.rel (%p334) target = $region32
      $region31: #{forward.1} parent=27 // pred_region
        _
      $region32: #{forward.1} parent=27 // pred_fallthru
        _
    $region28: #{forward.1} parent=5 // pred_fallthru
      _
    %p337 = scmp.le.s32.totalorder 2, %s8
    // Predicated region
    $region33: #{forward.1} parent=5 // pred_check
      %p338 = pneg %p337
    $region34: #{forward.1} parent=5 // pred_check_branch
      %340 = sbr.rel (%p338) target = $region36
    $region35: #{forward.1} parent=5 // pred_region
      %s341 = ssub.s32 %s8, 2
      // Predicated region
      $region37: #{forward.1} parent=35 // pred_check
        %p342 = pneg %p84
      $region38: #{forward.1} parent=35 // pred_check_branch
        %344 = sbr.rel (%p342) target = $region40
      $region39: #{forward.1} parent=35 // pred_region
        %p345 = scmp.lt.s32.totalorder %s14, 1
        %s346 = scalar_select %p345, %s14, 1
        %s347 = smul.addr %s346, 8
        %s348 = scalar_lea.vmem %s2, %s347
      $region40: #{forward.1} parent=35 // pred_fallthru
        _
    $region36: #{forward.1} parent=5 // pred_fallthru
      _
  $region6: #{forward.1} parent=0 // loop_footer
    %s12 = sadd.s32 1, %s8
  $region7: #{forward.1} parent=0 // loop_footer_branch
    %7 = sbr.rel target = $region3
  $region8: #{forward.1} parent=0 // loop_exit
    _

</llo_original>
